<compile_context>
chip_gen: v5e
topology: v5e:2x2
jax: 0.10.0
libtpu: 0.0.40
codegen_flags: <defaults>
</compile_context>

<pallas_src>
import functools

import jax
import jax.numpy as jnp
from jax.experimental import pallas as pl
from jax.experimental.pallas import tpu as pltpu

_EPS = 1e-5

_VMEM_LIMIT_BYTES = 48 * 1024 * 1024   # safe on v7x (64 MiB/TC), ample on v5e/v6e
_VMEM_TILE_BUDGET = 24 * 1024 * 1024   # what the TB picker is allowed to use


def _compute_dtype(dtype):
    """Keep bf16 streams in bf16 (v6e/v7x have bf16 VALU); everything else f32."""
    dtype = jnp.dtype(dtype)
    if dtype == jnp.dtype(jnp.bfloat16) or dtype == jnp.dtype(jnp.float32):
        return dtype
    return jnp.dtype(jnp.float32)


def _fused_columns(a_c, b_cw, inv, ca, cb):
    """[centroid_a | centroid_b | cov columns] as (TB, 3, 1) f32 pieces.

    cov[t, i, j] = inv[t] * sum_n a_c[t, i, n] * b_cw[t, j, n], computed as
    three broadcast-multiply + lane-reduction passes (VPU + XLU) rather than
    TB serialized 3x3 MXU matmuls.
    """
    cols = [ca, cb]
    for j in range(3):
        cols.append(
            jnp.sum(a_c * b_cw[:, j:j + 1, :], axis=2, keepdims=True,
                    dtype=jnp.float32) * inv)
    return cols


def _weighted_kernel(src_ref, corr_ref, w_ref, out_ref):
    # src_ref / corr_ref: (TB, 3, N); w_ref: (TB, 1, N); out_ref: (TB, 3, 5).
    cdt = _compute_dtype(src_ref.dtype)
    a = src_ref[...].astype(cdt)
    b = corr_ref[...].astype(cdt)
    w = w_ref[...].astype(cdt)

    # One scalar normalization per batch element instead of an N-wide divide;
    # reductions accumulate in f32 even for bf16 streams.
    inv = 1.0 / (jnp.sum(w, axis=2, keepdims=True, dtype=jnp.float32) + _EPS)

    ca = jnp.sum(a * w, axis=2, keepdims=True, dtype=jnp.float32) * inv   # (TB,3,1)
    cb = jnp.sum(b * w, axis=2, keepdims=True, dtype=jnp.float32) * inv   # (TB,3,1)

    a_c = a - ca.astype(cdt)            # centered, still in streaming dtype
    b_cw = (b - cb.astype(cdt)) * w

    # Single fused store: [centroid_a | centroid_b | cov] -> (TB, 3, 5).
    out_ref[...] = jnp.concatenate(_fused_columns(a_c, b_cw, inv, ca, cb), axis=-1)


def _uniform_kernel(n_points, src_ref, corr_ref, out_ref):
    # Uniform-weights fast path: the 1/N weights are never materialized or
    # streamed from HBM.
    cdt = _compute_dtype(src_ref.dtype)
    a = src_ref[...].astype(cdt)
    b = corr_ref[...].astype(cdt)

    inv = 1.0 / (float(n_points) * (1.0 + _EPS))   # static scalar

    ca = jnp.sum(a, axis=2, keepdims=True, dtype=jnp.float32) * inv
    cb = jnp.sum(b, axis=2, keepdims=True, dtype=jnp.float32) * inv

    a_c = a - ca.astype(cdt)
    b_c = b - cb.astype(cdt)

    out_ref[...] = jnp.concatenate(_fused_columns(a_c, b_c, inv, ca, cb), axis=-1)


def _pick_tb(B, N, in_itemsize, budget_bytes=_VMEM_TILE_BUDGET):
    """Largest per-step batch tile that (a) fits the VMEM budget counting the
    double-buffered input blocks *and* the full-size working temporaries,
    (b) leaves >= 2 grid steps (megacore / pipelining), and (c) divides B."""
    lanes = ((int(N) + 127) // 128) * 128
    in_itemsize = max(int(in_itemsize), 1)
    # Per batch element: 2 buffers x (src + corr + weights) blocks, each padded
    # to 8 sublanes, at the input itemsize, plus ~5 full-width f32 working
    # temporaries (a_c, b_cw, per-column products, ...).
    per_b = 2 * 3 * 8 * lanes * in_itemsize + 5 * 8 * lanes * 4
    tb = max(1, min(int(B), budget_bytes // per_b))
    if B >= 2:                          # guarantee >= 2 grid steps
        tb = min(tb, max(1, B // 2))
    while B % tb != 0:                  # snap to a divisor of B (no pad/ragged)
        tb -= 1
    return tb


def _snap_tb(B, tb):
    tb = max(1, min(int(tb), int(B)))
    while B % tb != 0:
        tb -= 1
    return tb


def _centroid_cov(src, src_corr, weights=None, tb=None):
    """Fused weighted-centroid + covariance Pallas call.

    src, src_corr: (B, 3, N); weights: (B, N) or None (uniform fast path).
    Returns centroid_a (B, 3), centroid_b (B, 3), cov (B, 3, 3), all float32.
    """
    B, d, N = src.shape
    assert d == 3, "point clouds must be (B, 3, N)"

    if tb is None:
        TB = _pick_tb(B, N, jnp.dtype(src.dtype).itemsize)
    else:
        TB = _snap_tb(B, tb)
    num_blocks = B // TB

    cloud_spec = pl.BlockSpec((TB, 3, N), lambda b: (b, 0, 0))
    out_spec = pl.BlockSpec((TB, 3, 5), lambda b: (b, 0, 0))

    if weights is None:
        kernel = functools.partial(_uniform_kernel, N)
        in_specs = [cloud_spec, cloud_spec]
        operands = (src, src_corr)
    else:
        kernel = _weighted_kernel
        in_specs = [cloud_spec, cloud_spec,
                    pl.BlockSpec((TB, 1, N), lambda b: (b, 0, 0))]
        operands = (src, src_corr, weights.reshape(B, 1, N))

    # TODO(synk): for extreme N where even TB=1 overflows VMEM, add a second
    # "arbitrary" grid axis over N with centered two-pass accumulators.
    # TODO(synk): sublane-densifying to (B*3, N) blocks (8/3x less VMEM/VPU
    # waste, mainly a v7x win) needs an in-kernel sublane broadcast of the
    # weight rows; kept the channels-on-sublanes layout for robustness.
    out = pl.pallas_call(
        kernel,
        out_shape=jax.ShapeDtypeStruct((B, 3, 5), jnp.float32),
        grid_spec=pltpu.PrefetchScalarGridSpec(
            num_scalar_prefetch=0,
            grid=(num_blocks,),
            in_specs=in_specs,
            out_specs=out_spec),
        compiler_params=pltpu.CompilerParams(
            dimension_semantics=("parallel",),
            vmem_limit_bytes=_VMEM_LIMIT_BYTES),
    )(*operands)

    centroid_a = out[:, :, 0]     # (B, 3)
    centroid_b = out[:, :, 1]     # (B, 3)
    cov = out[:, :, 2:5]          # (B, 3, 3)
    return centroid_a, centroid_b, cov


def svd_weighted(src, src_corr, weights=None, tb=None):
    """Forward pass of SVD_Weighted.

    Args:
      src, src_corr: (B, 3, N) point clouds (the PyTorch module receives them
                     in (B, 3, N) and transposes internally to (B, N, 3)).
      weights: optional (B, N); None takes the uniform (1/N) fast path.
      tb: optional per-step batch-tile override (testing / tuning); it is
          snapped down to a divisor of B.

    Returns:
      rot_mat: (B, 3, 3), translation: (B, 3) so that rot @ a + t ~= b.
    """
    B, d, N = src.shape
    centroid_a, centroid_b, cov = _centroid_cov(src, src_corr, weights, tb=tb)

    # TODO(synk): no Pallas/Mosaic primitive for a batched 3x3 SVD; it runs in
    # plain JAX on the tiny (B, 3, 3) covariance (negligible cost).
    u, _, vh = jnp.linalg.svd(cov)          # cov = u @ diag(s) @ vh
    v = jnp.swapaxes(vh, -1, -2)            # torch.svd's V
    ut = jnp.swapaxes(u, -1, -2)

    rot_mat_pos = v @ ut
    v_neg = v.at[:, :, 2].multiply(-1.0)    # flip third column of V
    rot_mat_neg = v_neg @ ut

    det_pos = jnp.linalg.det(rot_mat_pos)
    rot_mat = jnp.where(det_pos[:, None, None] > 0, rot_mat_pos, rot_mat_neg)

    translation = -rot_mat @ centroid_a[:, :, None] + centroid_b[:, :, None]
    return rot_mat, translation.reshape(B, 3)


def _reference(src, src_corr, weights):
    """Pure-JAX reference mirroring the PyTorch code (for a sanity check)."""
    a = jnp.swapaxes(src, -1, -2)           # (B, N, 3)
    b = jnp.swapaxes(src_corr, -1, -2)      # (B, N, 3)
    wn = weights[..., None] / (jnp.sum(weights[..., None], axis=1, keepdims=True) + _EPS)
    ca = jnp.sum(a * wn, axis=1)
    cb = jnp.sum(b * wn, axis=1)
    a_c = a - ca[:, None, :]
    b_c = b - cb[:, None, :]
    cov = jnp.swapaxes(a_c, -2, -1) @ (b_c * wn)
    u, s, vh = jnp.linalg.svd(cov)
    v = jnp.swapaxes(vh, -1, -2)
    rot_pos = v @ jnp.swapaxes(u, -1, -2)
    v_neg = v.at[:, :, 2].multiply(-1.0)
    rot_neg = v_neg @ jnp.swapaxes(u, -1, -2)
    rot = jnp.where(jnp.linalg.det(rot_pos)[:, None, None] > 0, rot_pos, rot_neg)
    t = (-rot @ ca[:, :, None] + cb[:, :, None]).reshape(src.shape[0], 3)
    return rot, t


def _make_problem(key, B, N):
    """Build src_corr as a rigid transform of src plus noise (well-posed)."""
    k1, k2, k3, k4, k5 = jax.random.split(key, 5)
    src = jax.random.normal(k1, (B, 3, N), dtype=jnp.float32)
    angles = jax.random.uniform(k2, (B,), minval=-0.5, maxval=0.5)
    c, s = jnp.cos(angles), jnp.sin(angles)
    zeros, ones = jnp.zeros_like(c), jnp.ones_like(c)
    rot_true = jnp.stack(
        [jnp.stack([c, -s, zeros], -1),
         jnp.stack([s, c, zeros], -1),
         jnp.stack([zeros, zeros, ones], -1)], -2)           # (B, 3, 3)
    t_true = jax.random.normal(k3, (B, 3, 1), dtype=jnp.float32)
    src_corr = rot_true @ src + t_true + 0.01 * jax.random.normal(
        k4, (B, 3, N), dtype=jnp.float32)
    weights = jax.random.uniform(k5, (B, N), minval=0.1, maxval=1.0,
                                 dtype=jnp.float32)
    return src, src_corr, weights


if __name__ == "__main__":
    key = jax.random.PRNGKey(0)
    k_a, k_b = jax.random.split(key)

    # --- main check: B=2, N=128 (weighted path, auto TB -> 2 grid steps) -----
    src, src_corr, weights = _make_problem(k_a, B=2, N=128)
    rot_mat, translation = svd_weighted(src, src_corr, weights)
    jax.block_until_ready((rot_mat, translation))

    assert bool(jnp.all(jnp.linalg.det(rot_mat) > 0))
    rot_ref, t_ref = _reference(src, src_corr, weights)
    assert jnp.allclose(rot_mat, rot_ref, atol=1e-4)
    assert jnp.allclose(translation, t_ref, atol=1e-4)

    # --- uniform-weights fast path (no weights streamed from HBM) ------------
    rot_u, t_u = svd_weighted(src, src_corr, None)
    jax.block_until_ready((rot_u, t_u))

    w_uniform = jnp.ones((2, 128), dtype=jnp.float32) / 128.0
    rot_uref, t_uref = _reference(src, src_corr, w_uniform)
    assert bool(jnp.all(jnp.linalg.det(rot_u) > 0))
    assert jnp.allclose(rot_u, rot_uref, atol=1e-4)
    assert jnp.allclose(t_u, t_uref, atol=1e-4)

    # --- odd batch + explicit tile: TB snaps to a divisor of B (no jnp.pad) --
    src2, src_corr2, weights2 = _make_problem(k_b, B=5, N=128)
    rot2, t2 = svd_weighted(src2, src_corr2, weights2, tb=2)   # snaps to TB=1
    jax.block_until_ready((rot2, t2))

    assert bool(jnp.all(jnp.linalg.det(rot2) > 0))
    rot_ref2, t_ref2 = _reference(src2, src_corr2, weights2)
    assert jnp.allclose(rot2, rot_ref2, atol=1e-4)
    assert jnp.allclose(t2, t_ref2, atol=1e-4)

    print("KERNEL_OK")
</pallas_src>

<mosaic_0001>
module attributes {stable_mosaic.version = 11 : i64} {
  func.func @_weighted_kernel(%arg0: i32, %arg1: memref<1x3x128xf32, #tpu.memory_space<vmem>>, %arg2: memref<1x3x128xf32, #tpu.memory_space<vmem>>, %arg3: memref<1x1x128xf32, #tpu.memory_space<vmem>>, %arg4: memref<1x3x5xf32, #tpu.memory_space<vmem>>) attributes {dimension_semantics = [#tpu.dimension_semantics<parallel>], iteration_bounds = array<i64: 2>, scalar_prefetch = 0 : i64, scratch_operands = 0 : i64, tpu.core_type = #tpu.core_type<tc>, window_params = [{transform_indices = @transform_0, window_bounds = array<i64: 1, 3, 128>}, {transform_indices = @transform_1, window_bounds = array<i64: 1, 3, 128>}, {transform_indices = @transform_2, window_bounds = array<i64: 1, 1, 128>}, {transform_indices = @transform_3, window_bounds = array<i64: 1, 3, 5>}]} {
    %c0 = arith.constant 0 : index
    %c0_0 = arith.constant 0 : index
    %c0_1 = arith.constant 0 : index
    %0 = vector.load %arg1[%c0, %c0_0, %c0_1] : memref<1x3x128xf32, #tpu.memory_space<vmem>>, vector<1x3x128xf32>
    %c0_2 = arith.constant 0 : index
    %c0_3 = arith.constant 0 : index
    %c0_4 = arith.constant 0 : index
    %1 = vector.load %arg2[%c0_2, %c0_3, %c0_4] : memref<1x3x128xf32, #tpu.memory_space<vmem>>, vector<1x3x128xf32>
    %c0_5 = arith.constant 0 : index
    %c0_6 = arith.constant 0 : index
    %c0_7 = arith.constant 0 : index
    %2 = vector.load %arg3[%c0_5, %c0_6, %c0_7] : memref<1x1x128xf32, #tpu.memory_space<vmem>>, vector<1x1x128xf32>
    %cst = arith.constant dense<0.000000e+00> : vector<1x1xf32>
    %3 = vector.multi_reduction <add>, %2, %cst [2] : vector<1x1x128xf32> to vector<1x1xf32>
    %4 = vector.shape_cast %3 : vector<1x1xf32> to vector<1x1x1xf32>
    %cst_8 = arith.constant 9.99999974E-6 : f32
    %5 = vector.broadcast %cst_8 : f32 to vector<1x1x1xf32>
    %6 = arith.addf %4, %5 : vector<1x1x1xf32>
    %cst_9 = arith.constant 1.000000e+00 : f32
    %7 = vector.broadcast %cst_9 : f32 to vector<1x1x1xf32>
    %8 = arith.divf %7, %6 : vector<1x1x1xf32>
    %9 = vector.broadcast %2 : vector<1x1x128xf32> to vector<1x3x128xf32>
    %10 = arith.mulf %0, %9 : vector<1x3x128xf32>
    %cst_10 = arith.constant dense<0.000000e+00> : vector<1x3xf32>
    %11 = vector.multi_reduction <add>, %10, %cst_10 [2] : vector<1x3x128xf32> to vector<1x3xf32>
    %12 = vector.shape_cast %11 : vector<1x3xf32> to vector<1x3x1xf32>
    %13 = vector.broadcast %8 : vector<1x1x1xf32> to vector<1x3x1xf32>
    %14 = arith.mulf %12, %13 : vector<1x3x1xf32>
    %15 = vector.broadcast %2 : vector<1x1x128xf32> to vector<1x3x128xf32>
    %16 = arith.mulf %1, %15 : vector<1x3x128xf32>
    %cst_11 = arith.constant dense<0.000000e+00> : vector<1x3xf32>
    %17 = vector.multi_reduction <add>, %16, %cst_11 [2] : vector<1x3x128xf32> to vector<1x3xf32>
    %18 = vector.shape_cast %17 : vector<1x3xf32> to vector<1x3x1xf32>
    %19 = vector.broadcast %8 : vector<1x1x1xf32> to vector<1x3x1xf32>
    %20 = arith.mulf %18, %19 : vector<1x3x1xf32>
    %21 = vector.broadcast %14 : vector<1x3x1xf32> to vector<1x3x128xf32>
    %22 = arith.subf %0, %21 : vector<1x3x128xf32>
    %23 = vector.broadcast %20 : vector<1x3x1xf32> to vector<1x3x128xf32>
    %24 = arith.subf %1, %23 : vector<1x3x128xf32>
    %25 = vector.broadcast %2 : vector<1x1x128xf32> to vector<1x3x128xf32>
    %26 = arith.mulf %24, %25 : vector<1x3x128xf32>
    %27 = vector.extract_strided_slice %26 {offsets = [0, 0, 0], sizes = [1, 1, 128], strides = [1, 1, 1]} : vector<1x3x128xf32> to vector<1x1x128xf32>
    %28 = vector.broadcast %27 : vector<1x1x128xf32> to vector<1x3x128xf32>
    %29 = arith.mulf %22, %28 : vector<1x3x128xf32>
    %cst_12 = arith.constant dense<0.000000e+00> : vector<1x3xf32>
    %30 = vector.multi_reduction <add>, %29, %cst_12 [2] : vector<1x3x128xf32> to vector<1x3xf32>
    %31 = vector.shape_cast %30 : vector<1x3xf32> to vector<1x3x1xf32>
    %32 = vector.broadcast %8 : vector<1x1x1xf32> to vector<1x3x1xf32>
    %33 = arith.mulf %31, %32 : vector<1x3x1xf32>
    %34 = vector.extract_strided_slice %26 {offsets = [0, 1, 0], sizes = [1, 1, 128], strides = [1, 1, 1]} : vector<1x3x128xf32> to vector<1x1x128xf32>
    %35 = vector.broadcast %34 : vector<1x1x128xf32> to vector<1x3x128xf32>
    %36 = arith.mulf %22, %35 : vector<1x3x128xf32>
    %cst_13 = arith.constant dense<0.000000e+00> : vector<1x3xf32>
    %37 = vector.multi_reduction <add>, %36, %cst_13 [2] : vector<1x3x128xf32> to vector<1x3xf32>
    %38 = vector.shape_cast %37 : vector<1x3xf32> to vector<1x3x1xf32>
    %39 = vector.broadcast %8 : vector<1x1x1xf32> to vector<1x3x1xf32>
    %40 = arith.mulf %38, %39 : vector<1x3x1xf32>
    %41 = vector.extract_strided_slice %26 {offsets = [0, 2, 0], sizes = [1, 1, 128], strides = [1, 1, 1]} : vector<1x3x128xf32> to vector<1x1x128xf32>
    %42 = vector.broadcast %41 : vector<1x1x128xf32> to vector<1x3x128xf32>
    %43 = arith.mulf %22, %42 : vector<1x3x128xf32>
    %cst_14 = arith.constant dense<0.000000e+00> : vector<1x3xf32>
    %44 = vector.multi_reduction <add>, %43, %cst_14 [2] : vector<1x3x128xf32> to vector<1x3xf32>
    %45 = vector.shape_cast %44 : vector<1x3xf32> to vector<1x3x1xf32>
    %46 = vector.broadcast %8 : vector<1x1x1xf32> to vector<1x3x1xf32>
    %47 = arith.mulf %45, %46 : vector<1x3x1xf32>
    %48 = tpu.concatenate %14, %20, %33, %40, %47 in 2 : vector<1x3x1xf32>, vector<1x3x1xf32>, vector<1x3x1xf32>, vector<1x3x1xf32>, vector<1x3x1xf32> -> vector<1x3x5xf32>
    %c0_15 = arith.constant 0 : index
    %c0_16 = arith.constant 0 : index
    %c0_17 = arith.constant 0 : index
    %49 = vector.load %arg4[%c0_15, %c0_16, %c0_17] : memref<1x3x5xf32, #tpu.memory_space<vmem>>, vector<1x3x5xf32>
    tpu.vector_store %arg4[%c0_15, %c0_16, %c0_17], %48 {strides = array<i32>} : memref<1x3x5xf32, #tpu.memory_space<vmem>>, vector<1x3x5xf32>,
    return
  }
  func.func @transform_0(%arg0: i32) -> (i32, i32, i32) {
    %c0_i32 = arith.constant 0 : i32
    %c0_i32_0 = arith.constant 0 : i32
    %c0_i32_1 = arith.constant 0 : i32
    return %arg0, %c0_i32, %c0_i32_0 : i32, i32, i32
  }
  func.func @transform_1(%arg0: i32) -> (i32, i32, i32) {
    %c0_i32 = arith.constant 0 : i32
    %c0_i32_0 = arith.constant 0 : i32
    %c0_i32_1 = arith.constant 0 : i32
    return %arg0, %c0_i32, %c0_i32_0 : i32, i32, i32
  }
  func.func @transform_2(%arg0: i32) -> (i32, i32, i32) {
    %c0_i32 = arith.constant 0 : i32
    %c0_i32_0 = arith.constant 0 : i32
    %c0_i32_1 = arith.constant 0 : i32
    return %arg0, %c0_i32, %c0_i32_0 : i32, i32, i32
  }
  func.func @transform_3(%arg0: i32) -> (i32, i32, i32) {
    %c0_i32 = arith.constant 0 : i32
    %c0_i32_0 = arith.constant 0 : i32
    %c0_i32_1 = arith.constant 0 : i32
    return %arg0, %c0_i32, %c0_i32_0 : i32, i32, i32
  }
}

</mosaic_0001>

<llo_original>
// kernel: tpu_custom_call.1
$region0: #{tpu_custom_call.1}
  #allocation0 [shape = 'u32[]', space=smem, size = 0x4, offset = 0x4, fixed_abs, tag = 'smem constant byte address 0x4 - core index']
  #allocation1 [shape = 'u32[72,128]{1,0:T(1,128)}', space=vmem, size = 0x9000, scoped, tag = 'internal scratch']
  %s0 = inlined_call_operand.vmem [shape: f32[2,3,128], index: 0, kind: input, shape index: {}]
  %s1 = inlined_call_operand.vmem [shape: f32[2,3,128], index: 1, kind: input, shape index: {}]
  %s2 = inlined_call_operand.vmem [shape: f32[2,1,128], index: 2, kind: input, shape index: {}]
  %s3 = inlined_call_operand.vmem [shape: f32[2,3,5], index: 3, kind: output, shape index: {}]
  %s4 = sld [smem:[#allocation0]]
  $region45: #{tpu_custom_call.1} parent=0
    _
  %s6 = ssub.s32 1, %s4
  %s7 = scalar_select 0, %s6, %s4
  loop: start=0, step=1, limit=4
  $region2: #{tpu_custom_call.1} parent=0 // loop_pre_header
    _
  $region3: #{tpu_custom_call.1} parent=0 // loop_header
    %s9 = sphi 0, %s13
    %p10 = scmp.ge.s32.totalorder %s9, 4
    %s19 = sphi 0, %s21
    %s22 = sphi 0, %s19
    %s23 = sphi 0, %s22
    %s39 = sphi 0, %s23
    %s45 = sphi 0, %s47
    %s48 = sphi 0, %s45
    %s49 = sphi 0, %s48
    %s65 = sphi 0, %s49
    %s71 = sphi 0, %s73
    %s74 = sphi 0, %s71
    %s75 = sphi 0, %s74
    %s91 = sphi 0, %s75
    %s97 = sphi 0, %s99
    %s100 = sphi 0, %s97
    %s101 = sphi 0, %s100
    %s117 = sphi 0, %s101
  $region4: #{tpu_custom_call.1} parent=0 // loop_header_branch
    %12 = sbr.rel (%p10) target = $region8
  $region5: #{tpu_custom_call.1} parent=0 // loop_body
    %s14 = ssub.s32 %s9, 1
    %s15 = ssub.s32 %s9, 2
    %s16 = sadd.s32 %s9, 1
    %s17 = ssub.s32 %s9, %s16
    %p18 = scmp.eq.s32.totalorder %s17, 0
    %s20 = sadd.s32 %s19, 1
    %s21 = scalar_select %p18, %s19, %s20
    %p24 = pneg %p18
    %p25 = scmp.eq.s32.totalorder %s9, 1
    %p26 = por %p24, %p25
    %p27 = scmp.ne.s32.totalorder %s19, %s22
    %p28 = scmp.eq.s32.totalorder %s9, 0
    %p29 = por %p27, %p28
    %p30 = scmp.ne.s32.totalorder %s19, %s22
    %p31 = scmp.eq.s32.totalorder %s14, 1
    %p32 = por %p30, %p31
    %p33 = scmp.ne.s32.totalorder %s22, %s23
    %p34 = scmp.eq.s32.totalorder %s14, 0
    %p35 = por %p33, %p34
    %p36 = scmp.ne.s32.totalorder %s22, %s23
    %p37 = scmp.eq.s32.totalorder %s15, 1
    %p38 = por %p36, %p37
    %p40 = scmp.ne.s32.totalorder %s23, %s39
    %p41 = scmp.eq.s32.totalorder %s15, 0
    %p42 = por %p40, %p41
    %s43 = ssub.s32 %s9, %s16
    %p44 = scmp.eq.s32.totalorder %s43, 0
    %s46 = sadd.s32 %s45, 1
    %s47 = scalar_select %p44, %s45, %s46
    %p50 = pneg %p44
    %p51 = scmp.eq.s32.totalorder %s9, 1
    %p52 = por %p50, %p51
    %p53 = scmp.ne.s32.totalorder %s45, %s48
    %p54 = scmp.eq.s32.totalorder %s9, 0
    %p55 = por %p53, %p54
    %p56 = scmp.ne.s32.totalorder %s45, %s48
    %p57 = scmp.eq.s32.totalorder %s14, 1
    %p58 = por %p56, %p57
    %p59 = scmp.ne.s32.totalorder %s48, %s49
    %p60 = scmp.eq.s32.totalorder %s14, 0
    %p61 = por %p59, %p60
    %p62 = scmp.ne.s32.totalorder %s48, %s49
    %p63 = scmp.eq.s32.totalorder %s15, 1
    %p64 = por %p62, %p63
    %p66 = scmp.ne.s32.totalorder %s49, %s65
    %p67 = scmp.eq.s32.totalorder %s15, 0
    %p68 = por %p66, %p67
    %s69 = ssub.s32 %s9, %s16
    %p70 = scmp.eq.s32.totalorder %s69, 0
    %s72 = sadd.s32 %s71, 1
    %s73 = scalar_select %p70, %s71, %s72
    %p76 = pneg %p70
    %p77 = scmp.eq.s32.totalorder %s9, 1
    %p78 = por %p76, %p77
    %p79 = scmp.ne.s32.totalorder %s71, %s74
    %p80 = scmp.eq.s32.totalorder %s9, 0
    %p81 = por %p79, %p80
    %p82 = scmp.ne.s32.totalorder %s71, %s74
    %p83 = scmp.eq.s32.totalorder %s14, 1
    %p84 = por %p82, %p83
    %p85 = scmp.ne.s32.totalorder %s74, %s75
    %p86 = scmp.eq.s32.totalorder %s14, 0
    %p87 = por %p85, %p86
    %p88 = scmp.ne.s32.totalorder %s74, %s75
    %p89 = scmp.eq.s32.totalorder %s15, 1
    %p90 = por %p88, %p89
    %p92 = scmp.ne.s32.totalorder %s75, %s91
    %p93 = scmp.eq.s32.totalorder %s15, 0
    %p94 = por %p92, %p93
    %s95 = ssub.s32 %s9, %s16
    %p96 = scmp.eq.s32.totalorder %s95, 0
    %s98 = sadd.s32 %s97, 1
    %s99 = scalar_select %p96, %s97, %s98
    %p102 = pneg %p96
    %p103 = scmp.eq.s32.totalorder %s9, 1
    %p104 = por %p102, %p103
    %p105 = scmp.ne.s32.totalorder %s97, %s100
    %p106 = scmp.eq.s32.totalorder %s9, 0
    %p107 = por %p105, %p106
    %p108 = scmp.ne.s32.totalorder %s97, %s100
    %p109 = scmp.eq.s32.totalorder %s14, 1
    %p110 = por %p108, %p109
    %p111 = scmp.ne.s32.totalorder %s100, %s101
    %p112 = scmp.eq.s32.totalorder %s14, 0
    %p113 = por %p111, %p112
    %p114 = scmp.ne.s32.totalorder %s100, %s101
    %p115 = scmp.eq.s32.totalorder %s15, 1
    %p116 = por %p114, %p115
    %p118 = scmp.ne.s32.totalorder %s101, %s117
    %p119 = scmp.eq.s32.totalorder %s15, 0
    %p120 = por %p118, %p119
    %p121 = scmp.le.s32.totalorder 1, %s9
    %p122 = scmp.lt.s32.totalorder %s9, 3
    %p123 = pnand %p121, %p122
    %p124 = pneg %p123
    // Predicated region
    $region9: #{tpu_custom_call.1} parent=5 // pred_check
      _
    $region10: #{tpu_custom_call.1} parent=5 // pred_check_branch
      %126 = sbr.rel (%p123) target = $region12
    $region11: #{tpu_custom_call.1} parent=5 // pred_region
      %s127 = ssub.s32 %s9, 1
    $region12: #{tpu_custom_call.1} parent=5 // pred_fallthru
      _
    %p128 = scmp.lt.s32.totalorder %s9, 2
    // Predicated region
    $region13: #{tpu_custom_call.1} parent=5 // pred_check
      %p129 = pneg %p128
    $region14: #{tpu_custom_call.1} parent=5 // pred_check_branch
      %131 = sbr.rel (%p129) target = $region16
    $region15: #{tpu_custom_call.1} parent=5 // pred_region
      // Predicated region
      $region17: #{tpu_custom_call.1} parent=15 // pred_check
        %p132 = pneg %p29
      $region18: #{tpu_custom_call.1} parent=15 // pred_check_branch
        %134 = sbr.rel (%p132) target = $region20
      $region19: #{tpu_custom_call.1} parent=15 // pred_region
        %p135 = scmp.lt.s32.totalorder %s9, 1
        %s136 = scalar_select %p135, %s9, 1
        %s137 = smul.addr %s136, 4
        %s138 = scalar_lea.vmem %s0, %s137
      $region20: #{tpu_custom_call.1} parent=15 // pred_fallthru
        _
      // Predicated region
      $region21: #{tpu_custom_call.1} parent=15 // pred_check
        %p139 = pneg %p55
      $region22: #{tpu_custom_call.1} parent=15 // pred_check_branch
        %141 = sbr.rel (%p139) target = $region24
      $region23: #{tpu_custom_call.1} parent=15 // pred_region
        %p142 = scmp.lt.s32.totalorder %s9, 1
        %s143 = scalar_select %p142, %s9, 1
        %s144 = smul.addr %s143, 4
        %s145 = scalar_lea.vmem %s1, %s144
      $region24: #{tpu_custom_call.1} parent=15 // pred_fallthru
        _
      // Predicated region
      $region25: #{tpu_custom_call.1} parent=15 // pred_check
        %p146 = pneg %p81
      $region26: #{tpu_custom_call.1} parent=15 // pred_check_branch
        %148 = sbr.rel (%p146) target = $region28
      $region27: #{tpu_custom_call.1} parent=15 // pred_region
        %p149 = scmp.lt.s32.totalorder %s9, 1
        %s150 = scalar_select %p149, %s9, 1
        %s151 = scalar_lea.vmem %s2, %s150
      $region28: #{tpu_custom_call.1} parent=15 // pred_fallthru
        _
    $region16: #{tpu_custom_call.1} parent=5 // pred_fallthru
      _
    %p152 = scmp.le.s32.totalorder 1, %s9
    %p153 = scmp.lt.s32.totalorder %s9, 3
    %p154 = pnand %p152, %p153
    %p155 = pneg %p154
    // Predicated region
    $region29: #{tpu_custom_call.1} parent=5 // pred_check
      _
    $region30: #{tpu_custom_call.1} parent=5 // pred_check_branch
      %157 = sbr.rel (%p154) target = $region32
    $region31: #{tpu_custom_call.1} parent=5 // pred_region
      %s158 = ssub.s32 %s9, 1
      %p159 = scmp.lt.s32.totalorder %s14, 1
      %s160 = scalar_select %p159, %s14, 1
      %s161 = smul.addr %s160, 4
      %s162 = scalar_lea.vmem %s0, %s161
      %p163 = pneg %p35
      %p164 = pneg %p32
      %p165 = scmp.lt.s32.totalorder %s14, 1
      %s166 = scalar_select %p165, %s14, 1
      %s167 = smul.addr %s166, 4
      %s168 = scalar_lea.vmem %s1, %s167
      %p169 = pneg %p61
      %p170 = pneg %p58
      %p171 = scmp.lt.s32.totalorder %s14, 1
      %s172 = scalar_select %p171, %s14, 1
      %s173 = scalar_lea.vmem %s2, %s172
      %p174 = pneg %p87
      %p175 = pneg %p84
      %p176 = pneg %p113
      %p177 = pneg %p110
      %p178 = scmp.lt.s32.totalorder %s14, 1
      %s179 = scalar_select %p178, %s14, 1
      %s180 = smul.addr %s179, 4
      %s181 = scalar_lea.vmem %s3, %s180
      %p182 = scmp.lt.s32.totalorder %s14, 1
      %s183 = scalar_select %p182, %s14, 1
      %s184 = smul.addr %s183, 4
      %s185 = scalar_lea.vmem %s0, %s184
      %p186 = scmp.lt.s32.totalorder %s14, 1
      %s187 = scalar_select %p186, %s14, 1
      %s188 = smul.addr %s187, 4
      %s189 = scalar_lea.vmem %s1, %s188
      %p190 = scmp.lt.s32.totalorder %s14, 1
      %s191 = scalar_select %p190, %s14, 1
      %s192 = scalar_lea.vmem %s2, %s191
      %p193 = scmp.lt.s32.totalorder %s14, 1
      %s194 = scalar_select %p193, %s14, 1
      %s195 = smul.addr %s194, 4
      %s196 = scalar_lea.vmem %s3, %s195
      %v197 = vld [vmem:[%s185] sm:$0x7]
      %v198 = vld [vmem:[%s189] sm:$0x7]
      %v199 = vld [vmem:[%s192] sm:$0x1]
      %vm200 = vcmask 1040384
      %v201 = vsel %vm200, %v199, 0.0
      %202 = vadd.xlane.f32.xlu0 %v201
      %v203 = vpop.xlane.xlu0 %202
      %v204 = vadd.f32 %v203, 1e-05
      %v205 = vrcp.pop %v204
      %v206 = vmul.f32 %v204, %v205
      %v207 = vsub.f32 1.0, %v206
      %v208 = vmul.f32 %v205, %v207
      %v209 = vadd.f32 %v205, %v208
      %vm210 = vweird.f32 %v204
      %vm211 = vweird.f32 %v205
      %vm212 = vmor %vm210, %vm211
      %v213 = vsel %vm212, %v205, %v209
      %v214 = vand.u32 2147483647, %v204
      %vm215 = vcmp.eq.f32.partialorder %v214, 8.507059e+37
      %v216 = vand.u32 %v204, 2147483648
      %v217 = vor.u32 1.1754944e-38, %v216
      %v218 = vsel %vm215, %v217, %v213
      %v219 = vmul.f32 1.0, %v218
      %v221 = vperm.slane %v199, 0
      %v223 = vmul.f32 %v197, %v221
      %vm224 = vcmask 1042432
      %v225 = vsel %vm224, %v223, 0.0
      %226 = vadd.xlane.f32.xlu0 %v225
      %v227 = vpop.xlane.xlu0 %226
      %v228 = vperm.slane %v219, 0
      %v229 = vmul.f32 %v227, %v228
      %v230 = vmul.f32 %v198, %v221
      %v231 = vsel %vm224, %v230, 0.0
      %232 = vadd.xlane.f32.xlu0 %v231
      %v233 = vpop.xlane.xlu0 %232
      %v234 = vmul.f32 %v233, %v228
      %v235 = vsub.f32 %v197, %v229
      %v236 = vsub.f32 %v198, %v234
      %v237 = vmul.f32 %v236, %v221
      %v238 = vperm.slane %v237, 0
      %v239 = vmul.f32 %v235, %v238
      %v240 = vsel %vm224, %v239, 0.0
      %241 = vadd.xlane.f32.xlu0 %v240
      %v242 = vpop.xlane.xlu0 %241
      %v243 = vmul.f32 %v242, %v228
      %v244 = vperm.slane %v237, 1
      %v245 = vmul.f32 %v235, %v244
      %v246 = vsel %vm224, %v245, 0.0
      %247 = vadd.xlane.f32.xlu0 %v246
      %v248 = vpop.xlane.xlu0 %247
      %v249 = vmul.f32 %v248, %v228
      %v250 = vperm.slane %v237, 2
      %v251 = vmul.f32 %v235, %v250
      %v252 = vsel %vm224, %v251, 0.0
      %253 = vadd.xlane.f32.xlu0 %v252
      %v254 = vpop.xlane.xlu0 %253
      %v255 = vmul.f32 %v254, %v228
      %vm256 = vcmask 7168
      %v257 = vsel %vm256, %v229, %v234
      %vm258 = vcmask 15360
      %v259 = vsel %vm258, %v257, %v243
      %vm260 = vcmask 23552
      %v261 = vsel %vm260, %v259, %v249
      %vm262 = vcmask 31744
      %v263 = vsel %vm262, %v261, %v255
      %vm264 = vcmask 34816
      %265 = vst.msk [vmem:[%s196] sm:$0x7] %vm264, %v263
      %p266 = scmp.lt.s32.totalorder %s14, 1
      %s267 = scalar_select %p266, %s14, 1
      %s268 = smul.addr %s267, 4
      %s269 = scalar_lea.vmem %s3, %s268
      // Predicated region
      $region33: #{tpu_custom_call.1} parent=31 // pred_check
        %p270 = pneg %p110
      $region34: #{tpu_custom_call.1} parent=31 // pred_check_branch
        %272 = sbr.rel (%p270) target = $region36
      $region35: #{tpu_custom_call.1} parent=31 // pred_region
        _
      $region36: #{tpu_custom_call.1} parent=31 // pred_fallthru
        _
    $region32: #{tpu_custom_call.1} parent=5 // pred_fallthru
      _
    %p273 = scmp.le.s32.totalorder 2, %s9
    // Predicated region
    $region37: #{tpu_custom_call.1} parent=5 // pred_check
      %p274 = pneg %p273
    $region38: #{tpu_custom_call.1} parent=5 // pred_check_branch
      %276 = sbr.rel (%p274) target = $region40
    $region39: #{tpu_custom_call.1} parent=5 // pred_region
      %s277 = ssub.s32 %s9, 2
      // Predicated region
      $region41: #{tpu_custom_call.1} parent=39 // pred_check
        %p278 = pneg %p116
      $region42: #{tpu_custom_call.1} parent=39 // pred_check_branch
        %280 = sbr.rel (%p278) target = $region44
      $region43: #{tpu_custom_call.1} parent=39 // pred_region
        %p281 = scmp.lt.s32.totalorder %s15, 1
        %s282 = scalar_select %p281, %s15, 1
        %s283 = smul.addr %s282, 4
        %s284 = scalar_lea.vmem %s3, %s283
      $region44: #{tpu_custom_call.1} parent=39 // pred_fallthru
        _
    $region40: #{tpu_custom_call.1} parent=5 // pred_fallthru
      _
  $region6: #{tpu_custom_call.1} parent=0 // loop_footer
    %s13 = sadd.s32 1, %s9
  $region7: #{tpu_custom_call.1} parent=0 // loop_footer_branch
    %8 = sbr.rel target = $region3
  $region8: #{tpu_custom_call.1} parent=0 // loop_exit
    _

</llo_original>
